<compile_context>
chip_gen: v6e
topology: v6e:2x2x1
jax: 0.10.0
libtpu: 0.0.40
codegen_flags: <defaults>
</compile_context>

<pallas_src>
import jax
import jax.numpy as jnp
from jax.experimental import pallas as pl
from jax.experimental.pallas import tpu as pltpu

MAX_LEN = 12
G = 128  # lane pad / alignment width


def _make_kernel(H, O, L):
    """Per-timestep kernel body with H/O/L baked in as static ints."""

    def kernel(tok_ref, emb_ref, h0_ref, enc_ref, w_ref, b_ref, out_ref, hid_sc):
        del tok_ref  # token ids are consumed by the embedding BlockSpec index_map
        t = pl.program_id(0)

        @pl.when(t == 0)
        def _():
            hid_sc[...] = h0_ref[...]

        emb = emb_ref[0]           # (1, H) embedding row for this step's token
        hid = hid_sc[...]          # (1, H) recurrent state (never leaves VMEM)

        # Two independent fused projections (can overlap on the MXU):
        #   emb @ [wa_emb | wc_emb]                  -> (1, 2G)
        #   hid @ [wa_hid | whh_r | whh_z | whh_n]   -> (1, 4G)
        emb_proj = jnp.dot(emb, w_ref[:, 0:2 * G],
                           preferred_element_type=jnp.float32)
        hid_proj = jnp.dot(hid, w_ref[:, 2 * G:6 * G],
                           preferred_element_type=jnp.float32)

        # attn_weights = softmax(attn(cat(emb, hid))); lanes >= L carry a
        # -1e9 bias so exp() underflows to exactly 0 there.
        attn_logits = emb_proj[:, 0:G] + hid_proj[:, 0:G] + b_ref[:, 0:G]
        m = jnp.max(attn_logits, axis=1, keepdims=True)
        e = jnp.exp(attn_logits - m)
        attn_w = e / jnp.sum(e, axis=1, keepdims=True)             # (1, G)

        # attn_applied = attn_weights @ encoder_outputs (rows >= L are zero).
        attn_applied = jnp.dot(attn_w, enc_ref[...],
                               preferred_element_type=jnp.float32)  # (1, H)

        # attn_combine(cat(emb, attn_applied)) then ReLU.
        combined = (emb_proj[:, G:G + H]
                    + jnp.dot(attn_applied, w_ref[:, 6 * G:6 * G + H],
                              preferred_element_type=jnp.float32)
                    + b_ref[:, G:G + H])
        x = jnp.maximum(combined, 0.0)                              # (1, H)

        # Single-step GRU; gate blocks [r|z|n] are 128-lane aligned.
        i_g = (jnp.dot(x, w_ref[:, 7 * G:10 * G],
                       preferred_element_type=jnp.float32)
               + b_ref[:, 2 * G:5 * G])                             # (1, 3G)
        h_g = hid_proj[:, G:4 * G] + b_ref[:, 5 * G:8 * G]          # (1, 3G)

        r = jax.nn.sigmoid(i_g[:, 0:H] + h_g[:, 0:H])
        z = jax.nn.sigmoid(i_g[:, G:G + H] + h_g[:, G:G + H])
        n = jnp.tanh(i_g[:, 2 * G:2 * G + H] + r * h_g[:, 2 * G:2 * G + H])
        h_new = (1.0 - z) * n + z * hid                             # (1, H)
        hid_sc[...] = h_new

        # output = log_softmax(out(h_new)); lanes >= O carry a -1e9 bias.
        logits = (jnp.dot(h_new, w_ref[:, 10 * G:11 * G],
                          preferred_element_type=jnp.float32)
                  + b_ref[:, 8 * G:9 * G])                          # (1, G)
        lm = jnp.max(logits, axis=1, keepdims=True)
        sh = logits - lm
        lse = jnp.log(jnp.sum(jnp.exp(sh), axis=1, keepdims=True))
        logp = sh - lse                                             # (1, G)

        # Single lane-dense (1, 128) writeback: [logp | h_new | attn_w | 0].
        out_ref[0] = jnp.concatenate(
            [logp[:, :O], h_new, attn_w[:, :L],
             jnp.zeros((1, G - O - H - L), jnp.float32)], axis=1)

    return kernel


def init_params(key, hidden_size, output_size, max_length=MAX_LEN):
    ks = jax.random.split(key, 12)
    H, O, L = hidden_size, output_size, max_length
    s = 1.0 / jnp.sqrt(H)
    s2 = 1.0 / jnp.sqrt(2 * H)

    def u(k, shape, scale):
        return jax.random.uniform(k, shape, jnp.float32, -scale, scale)

    return dict(
        embedding=jax.random.normal(ks[0], (O, H), jnp.float32),
        # attn: Linear(2H -> L), stored transposed (in, out)
        wa=u(ks[1], (2 * H, L), s2),
        ba=u(ks[2], (1, L), s2),
        # attn_combine: Linear(2H -> H), stored transposed
        wc=u(ks[3], (2 * H, H), s2),
        bc=u(ks[4], (1, H), s2),
        # GRU, gate blocks packed [r | z | n] along the output axis
        wih=u(ks[5], (H, 3 * H), s),
        bih=u(ks[6], (1, 3 * H), s),
        whh=u(ks[7], (H, 3 * H), s),
        bhh=u(ks[8], (1, 3 * H), s),
        # out: Linear(H -> O), stored transposed
        wo=u(ks[9], (H, O), s),
        bo=u(ks[10], (1, O), s),
    )


def pack_params(params):
    """Coalesce all weights/biases into two lane-aligned VMEM slabs."""
    H = params["embedding"].shape[1]
    O = params["wo"].shape[1]

    def padw(w):                      # (H, n) -> (H, 128), zero pad on lanes
        return jnp.pad(w, ((0, 0), (0, G - w.shape[1])))

    def padb(b, fill=0.0):            # (1, n) -> (1, 128)
        return jnp.pad(b, ((0, 0), (0, G - b.shape[1])), constant_values=fill)

    wa, wc = params["wa"], params["wc"]
    wih, whh = params["wih"], params["whh"]
    bih, bhh = params["bih"], params["bhh"]

    w_slab = jnp.concatenate([
        padw(wa[:H]), padw(wc[:H]),                                   # emb side
        padw(wa[H:]),                                                 # hid -> attn
        padw(whh[:, :H]), padw(whh[:, H:2 * H]), padw(whh[:, 2 * H:]),  # whh gates
        padw(wc[H:]),                                                 # attn_applied side
        padw(wih[:, :H]), padw(wih[:, H:2 * H]), padw(wih[:, 2 * H:]),  # wih gates
        padw(params["wo"]),
    ], axis=1).astype(jnp.float32)                                    # (H, 11*128)

    b_slab = jnp.concatenate([
        padb(params["ba"], fill=-1e9),
        padb(params["bc"]),
        padb(bih[:, :H]), padb(bih[:, H:2 * H]), padb(bih[:, 2 * H:]),
        padb(bhh[:, :H]), padb(bhh[:, H:2 * H]), padb(bhh[:, 2 * H:]),
        padb(params["bo"], fill=-1e9),
    ], axis=1).astype(jnp.float32)                                    # (1, 9*128)

    emb_tab = params["embedding"].reshape(O, 1, H).astype(jnp.float32)
    return w_slab, b_slab, emb_tab


def attn_decoder_decode(tokens, hidden0, encoder_outputs, params):
    """Run len(tokens) AttnDecoderRNN steps (teacher-forced) in ONE pallas_call.

    Returns (log_probs (T, O), hidden_per_step (T, H), attn_weights (T, L))."""
    H = params["embedding"].shape[1]
    O = params["wo"].shape[1]
    L = params["ba"].shape[1]
    assert O + H + L <= G, "packed per-step output must fit in one 128-lane row"

    tokens = jnp.asarray(tokens, jnp.int32).reshape(-1)
    T = tokens.shape[0]

    w_slab, b_slab, emb_tab = pack_params(params)
    enc_pad = jnp.zeros((G, H), jnp.float32).at[:L].set(
        encoder_outputs.astype(jnp.float32))
    h0 = hidden0.reshape(1, H).astype(jnp.float32)

    grid_spec = pltpu.PrefetchScalarGridSpec(
        num_scalar_prefetch=1,
        grid=(T,),
        in_specs=[
            # embedding row gather driven by the prefetched token ids
            pl.BlockSpec((1, 1, H), lambda t, tok: (tok[t], 0, 0)),
            # grid-invariant operands: DMA'd once, resident in VMEM
            pl.BlockSpec((1, H), lambda t, tok: (0, 0)),          # h0
            pl.BlockSpec((G, H), lambda t, tok: (0, 0)),          # encoder outputs (padded)
            pl.BlockSpec((H, 11 * G), lambda t, tok: (0, 0)),     # weight slab
            pl.BlockSpec((1, 9 * G), lambda t, tok: (0, 0)),      # bias slab
        ],
        out_specs=pl.BlockSpec((1, 1, G), lambda t, tok: (t, 0, 0)),
        scratch_shapes=[pltpu.VMEM((1, H), jnp.float32)],         # recurrent state carry
    )

    packed = pl.pallas_call(
        _make_kernel(H, O, L),
        out_shape=jax.ShapeDtypeStruct((T, 1, G), jnp.float32),
        grid_spec=grid_spec,
        compiler_params=pltpu.CompilerParams(
            dimension_semantics=("arbitrary",)),  # steps are sequentially dependent
    )(tokens, emb_tab, h0, enc_pad, w_slab, b_slab)

    packed = packed.reshape(T, G)
    return packed[:, :O], packed[:, O:O + H], packed[:, O + H:O + H + L]


def attn_decoder_forward(token_idx, hidden, encoder_outputs, params):
    """Single-step API matching the PyTorch module's forward (eval mode).
    hidden: (1,1,H). Returns (logprobs (1,O), hidden (1,1,H), attn_w (1,L))."""
    # TODO(synk): training-mode dropout (dropout_p=0.1) not implemented (eval only).
    H = params["embedding"].shape[1]
    logp, hids, attn_w = attn_decoder_decode(
        jnp.asarray([token_idx], jnp.int32), hidden, encoder_outputs, params)
    return logp, hids[-1].reshape(1, 1, H), attn_w


def reference_forward(token_idx, hidden, encoder_outputs, params):
    """Pure-JAX reference mirroring the PyTorch forward (eval mode)."""
    H = params["embedding"].shape[1]
    emb = params["embedding"][token_idx].reshape(1, H)
    hid = hidden.reshape(1, H)

    cat1 = jnp.concatenate([emb, hid], axis=1)
    attn_w = jax.nn.softmax(cat1 @ params["wa"] + params["ba"], axis=1)
    attn_applied = attn_w @ encoder_outputs
    cat2 = jnp.concatenate([emb, attn_applied], axis=1)
    x = jnp.maximum(cat2 @ params["wc"] + params["bc"], 0.0)

    i = x @ params["wih"] + params["bih"]
    h = hid @ params["whh"] + params["bhh"]
    r = jax.nn.sigmoid(i[:, :H] + h[:, :H])
    z = jax.nn.sigmoid(i[:, H:2 * H] + h[:, H:2 * H])
    n = jnp.tanh(i[:, 2 * H:] + r * h[:, 2 * H:])
    h_new = (1.0 - z) * n + z * hid

    out = jax.nn.log_softmax(h_new @ params["wo"] + params["bo"], axis=1)
    return out, h_new.reshape(1, 1, H), attn_w


if __name__ == "__main__":
    hidden_size, output_size, num_steps = 32, 16, 8

    key = jax.random.PRNGKey(0)
    kp, kh, ke, kt = jax.random.split(key, 4)
    params = init_params(kp, hidden_size, output_size)

    hidden0 = jax.random.normal(kh, (1, 1, hidden_size), jnp.float32)
    encoder_outputs = jax.random.normal(ke, (MAX_LEN, hidden_size), jnp.float32)
    tokens = jax.random.randint(kt, (num_steps,), 0, output_size, jnp.int32)

    # Fused multi-step decode: one pallas_call for all num_steps timesteps.
    logp, hiddens, attn_w = attn_decoder_decode(tokens, hidden0,
                                                encoder_outputs, params)
    jax.block_until_ready((logp, hiddens, attn_w))

    # Pure-JAX reference: step-by-step loop.
    hid = hidden0
    ref_logp, ref_attn = [], []
    for tok in list(tokens):
        o, hid, aw = reference_forward(int(tok), hid, encoder_outputs, params)
        ref_logp.append(o)
        ref_attn.append(aw)
    ref_logp = jnp.concatenate(ref_logp, axis=0)
    ref_attn = jnp.concatenate(ref_attn, axis=0)

    assert jnp.allclose(logp, ref_logp, rtol=1e-4, atol=1e-4)
    assert jnp.allclose(attn_w, ref_attn, rtol=1e-4, atol=1e-4)
    assert jnp.allclose(hiddens[-1].reshape(1, 1, hidden_size), hid,
                        rtol=1e-4, atol=1e-4)

    # Single-step API matching the PyTorch module signature.
    out1, h1, aw1 = attn_decoder_forward(3, hidden0, encoder_outputs, params)
    jax.block_until_ready((out1, h1, aw1))
    ro, rh, rw = reference_forward(3, hidden0, encoder_outputs, params)
    assert jnp.allclose(out1, ro, rtol=1e-4, atol=1e-4)
    assert jnp.allclose(h1, rh, rtol=1e-4, atol=1e-4)
    assert jnp.allclose(aw1, rw, rtol=1e-4, atol=1e-4)

    print("KERNEL_OK")
</pallas_src>

<mosaic_0001>
module attributes {stable_mosaic.version = 11 : i64} {
  func.func @kernel(%arg0: i32, %arg1: memref<8xi32, #tpu.memory_space<smem>>, %arg2: memref<1x1x32xf32, #tpu.memory_space<vmem>>, %arg3: memref<1x32xf32, #tpu.memory_space<vmem>>, %arg4: memref<128x32xf32, #tpu.memory_space<vmem>>, %arg5: memref<32x1408xf32, #tpu.memory_space<vmem>>, %arg6: memref<1x1152xf32, #tpu.memory_space<vmem>>, %arg7: memref<1x1x128xf32, #tpu.memory_space<vmem>>, %arg8: memref<1x32xf32, #tpu.memory_space<vmem>>) attributes {dimension_semantics = [#tpu.dimension_semantics<arbitrary>], iteration_bounds = array<i64: 8>, scalar_prefetch = 1 : i64, scratch_operands = 1 : i64, tpu.core_type = #tpu.core_type<tc>, window_params = [{transform_indices = @transform_0, window_bounds = array<i64: 1, 1, 32>}, {pipeline_mode = #tpu.pipeline_mode<synchronous>, transform_indices = @transform_1, window_bounds = array<i64: 1, 32>}, {pipeline_mode = #tpu.pipeline_mode<synchronous>, transform_indices = @transform_2, window_bounds = array<i64: 128, 32>}, {pipeline_mode = #tpu.pipeline_mode<synchronous>, transform_indices = @transform_3, window_bounds = array<i64: 32, 1408>}, {pipeline_mode = #tpu.pipeline_mode<synchronous>, transform_indices = @transform_4, window_bounds = array<i64: 1, 1152>}, {transform_indices = @transform_5, window_bounds = array<i64: 1, 1, 128>}]} {
    %c0_i32 = arith.constant 0 : i32
    %0 = arith.cmpi eq, %arg0, %c0_i32 : i32
    %1 = arith.extui %0 : i1 to i32
    %c0_i32_0 = arith.constant 0 : i32
    %2 = arith.cmpi ne, %1, %c0_i32_0 : i32
    scf.if %2 {
      %c0_39 = arith.constant 0 : index
      %c0_40 = arith.constant 0 : index
      %89 = vector.load %arg3[%c0_39, %c0_40] : memref<1x32xf32, #tpu.memory_space<vmem>>, vector<1x32xf32>
      %c0_41 = arith.constant 0 : index
      %c0_42 = arith.constant 0 : index
      %90 = vector.load %arg8[%c0_41, %c0_42] : memref<1x32xf32, #tpu.memory_space<vmem>>, vector<1x32xf32>
      tpu.vector_store %arg8[%c0_41, %c0_42], %89 {strides = array<i32>} : memref<1x32xf32, #tpu.memory_space<vmem>>, vector<1x32xf32>,
    } else {
    }
    %c0 = arith.constant 0 : index
    %c0_1 = arith.constant 0 : index
    %c0_2 = arith.constant 0 : index
    %3 = vector.load %arg2[%c0, %c0_1, %c0_2] : memref<1x1x32xf32, #tpu.memory_space<vmem>>, vector<1x1x32xf32>
    %4 = vector.shape_cast %3 : vector<1x1x32xf32> to vector<1x32xf32>
    %c0_3 = arith.constant 0 : index
    %c0_4 = arith.constant 0 : index
    %5 = vector.load %arg8[%c0_3, %c0_4] : memref<1x32xf32, #tpu.memory_space<vmem>>, vector<1x32xf32>
    %c0_5 = arith.constant 0 : index
    %c0_6 = arith.constant 0 : index
    %6 = vector.load %arg5[%c0_5, %c0_6] : memref<32x1408xf32, #tpu.memory_space<vmem>>, vector<32x256xf32>
    %cst = arith.constant dense<0.000000e+00> : vector<1x256xf32>
    %7 = tpu.matmul %4, %6, %cst {dimension_numbers = #tpu.dot_dimension_numbers<[1], [0], [0], [1], [0, 0, 1, 1], [], []>} : vector<1x32xf32>, vector<32x256xf32>, vector<1x256xf32> -> vector<1x256xf32>
    %c0_7 = arith.constant 0 : index
    %c256 = arith.constant 256 : index
    %8 = vector.load %arg5[%c0_7, %c256] : memref<32x1408xf32, #tpu.memory_space<vmem>>, vector<32x512xf32>
    %cst_8 = arith.constant dense<0.000000e+00> : vector<1x512xf32>
    %9 = tpu.matmul %5, %8, %cst_8 {dimension_numbers = #tpu.dot_dimension_numbers<[1], [0], [0], [1], [0, 0, 1, 1], [], []>} : vector<1x32xf32>, vector<32x512xf32>, vector<1x512xf32> -> vector<1x512xf32>
    %10 = vector.extract_strided_slice %7 {offsets = [0, 0], sizes = [1, 128], strides = [1, 1]} : vector<1x256xf32> to vector<1x128xf32>
    %11 = vector.extract_strided_slice %9 {offsets = [0, 0], sizes = [1, 128], strides = [1, 1]} : vector<1x512xf32> to vector<1x128xf32>
    %12 = arith.addf %10, %11 : vector<1x128xf32>
    %c0_9 = arith.constant 0 : index
    %c0_10 = arith.constant 0 : index
    %13 = vector.load %arg6[%c0_9, %c0_10] : memref<1x1152xf32, #tpu.memory_space<vmem>>, vector<1x128xf32>
    %14 = arith.addf %12, %13 : vector<1x128xf32>
    %cst_11 = arith.constant dense<0xFF800000> : vector<1xf32>
    %15 = vector.multi_reduction <maximumf>, %14, %cst_11 [1] : vector<1x128xf32> to vector<1xf32>
    %16 = vector.shape_cast %15 : vector<1xf32> to vector<1x1xf32>
    %17 = vector.broadcast %16 : vector<1x1xf32> to vector<1x128xf32>
    %18 = arith.subf %14, %17 : vector<1x128xf32>
    %19 = math.exp %18 : vector<1x128xf32>
    %cst_12 = arith.constant dense<0.000000e+00> : vector<1xf32>
    %20 = vector.multi_reduction <add>, %19, %cst_12 [1] : vector<1x128xf32> to vector<1xf32>
    %21 = vector.shape_cast %20 : vector<1xf32> to vector<1x1xf32>
    %22 = vector.broadcast %21 : vector<1x1xf32> to vector<1x128xf32>
    %23 = arith.divf %19, %22 : vector<1x128xf32>
    %c0_13 = arith.constant 0 : index
    %c0_14 = arith.constant 0 : index
    %24 = vector.load %arg4[%c0_13, %c0_14] : memref<128x32xf32, #tpu.memory_space<vmem>>, vector<128x32xf32>
    %cst_15 = arith.constant dense<0.000000e+00> : vector<1x32xf32>
    %25 = tpu.matmul %23, %24, %cst_15 {dimension_numbers = #tpu.dot_dimension_numbers<[1], [0], [0], [1], [0, 0, 1, 1], [], []>} : vector<1x128xf32>, vector<128x32xf32>, vector<1x32xf32> -> vector<1x32xf32>
    %26 = vector.extract_strided_slice %7 {offsets = [0, 128], sizes = [1, 32], strides = [1, 1]} : vector<1x256xf32> to vector<1x32xf32>
    %c0_16 = arith.constant 0 : index
    %c768 = arith.constant 768 : index
    %27 = vector.load %arg5[%c0_16, %c768] : memref<32x1408xf32, #tpu.memory_space<vmem>>, vector<32x32xf32>
    %cst_17 = arith.constant dense<0.000000e+00> : vector<1x32xf32>
    %28 = tpu.matmul %25, %27, %cst_17 {dimension_numbers = #tpu.dot_dimension_numbers<[1], [0], [0], [1], [0, 0, 1, 1], [], []>} : vector<1x32xf32>, vector<32x32xf32>, vector<1x32xf32> -> vector<1x32xf32>
    %29 = arith.addf %26, %28 : vector<1x32xf32>
    %c0_18 = arith.constant 0 : index
    %c128 = arith.constant 128 : index
    %30 = vector.load %arg6[%c0_18, %c128] : memref<1x1152xf32, #tpu.memory_space<vmem>>, vector<1x32xf32>
    %31 = arith.addf %29, %30 : vector<1x32xf32>
    %cst_19 = arith.constant 0.000000e+00 : f32
    %32 = vector.broadcast %cst_19 : f32 to vector<1x32xf32>
    %33 = arith.maximumf %31, %32 : vector<1x32xf32>
    %c0_20 = arith.constant 0 : index
    %c896 = arith.constant 896 : index
    %34 = vector.load %arg5[%c0_20, %c896] : memref<32x1408xf32, #tpu.memory_space<vmem>>, vector<32x384xf32>
    %cst_21 = arith.constant dense<0.000000e+00> : vector<1x384xf32>
    %35 = tpu.matmul %33, %34, %cst_21 {dimension_numbers = #tpu.dot_dimension_numbers<[1], [0], [0], [1], [0, 0, 1, 1], [], []>} : vector<1x32xf32>, vector<32x384xf32>, vector<1x384xf32> -> vector<1x384xf32>
    %c0_22 = arith.constant 0 : index
    %c256_23 = arith.constant 256 : index
    %36 = vector.load %arg6[%c0_22, %c256_23] : memref<1x1152xf32, #tpu.memory_space<vmem>>, vector<1x384xf32>
    %37 = arith.addf %35, %36 : vector<1x384xf32>
    %38 = vector.extract_strided_slice %9 {offsets = [0, 128], sizes = [1, 384], strides = [1, 1]} : vector<1x512xf32> to vector<1x384xf32>
    %c0_24 = arith.constant 0 : index
    %c640 = arith.constant 640 : index
    %39 = vector.load %arg6[%c0_24, %c640] : memref<1x1152xf32, #tpu.memory_space<vmem>>, vector<1x384xf32>
    %40 = arith.addf %38, %39 : vector<1x384xf32>
    %41 = vector.extract_strided_slice %37 {offsets = [0, 0], sizes = [1, 32], strides = [1, 1]} : vector<1x384xf32> to vector<1x32xf32>
    %42 = vector.extract_strided_slice %40 {offsets = [0, 0], sizes = [1, 32], strides = [1, 1]} : vector<1x384xf32> to vector<1x32xf32>
    %43 = arith.addf %41, %42 : vector<1x32xf32>
    %44 = arith.negf %43 : vector<1x32xf32>
    %45 = math.exp %44 : vector<1x32xf32>
    %cst_25 = arith.constant 1.000000e+00 : f32
    %46 = vector.broadcast %cst_25 : f32 to vector<1x32xf32>
    %47 = arith.addf %46, %45 : vector<1x32xf32>
    %48 = arith.divf %46, %47 : vector<1x32xf32>
    %49 = vector.extract_strided_slice %37 {offsets = [0, 128], sizes = [1, 32], strides = [1, 1]} : vector<1x384xf32> to vector<1x32xf32>
    %50 = vector.extract_strided_slice %40 {offsets = [0, 128], sizes = [1, 32], strides = [1, 1]} : vector<1x384xf32> to vector<1x32xf32>
    %51 = arith.addf %49, %50 : vector<1x32xf32>
    %52 = arith.negf %51 : vector<1x32xf32>
    %53 = math.exp %52 : vector<1x32xf32>
    %cst_26 = arith.constant 1.000000e+00 : f32
    %54 = vector.broadcast %cst_26 : f32 to vector<1x32xf32>
    %55 = arith.addf %54, %53 : vector<1x32xf32>
    %56 = arith.divf %54, %55 : vector<1x32xf32>
    %57 = vector.extract_strided_slice %37 {offsets = [0, 256], sizes = [1, 32], strides = [1, 1]} : vector<1x384xf32> to vector<1x32xf32>
    %58 = vector.extract_strided_slice %40 {offsets = [0, 256], sizes = [1, 32], strides = [1, 1]} : vector<1x384xf32> to vector<1x32xf32>
    %59 = arith.mulf %48, %58 : vector<1x32xf32>
    %60 = arith.addf %57, %59 : vector<1x32xf32>
    %61 = math.tanh %60 : vector<1x32xf32>
    %cst_27 = arith.constant 1.000000e+00 : f32
    %62 = vector.broadcast %cst_27 : f32 to vector<1x32xf32>
    %63 = arith.subf %62, %56 : vector<1x32xf32>
    %64 = arith.mulf %63, %61 : vector<1x32xf32>
    %65 = arith.mulf %56, %5 : vector<1x32xf32>
    %66 = arith.addf %64, %65 : vector<1x32xf32>
    %c0_28 = arith.constant 0 : index
    %c0_29 = arith.constant 0 : index
    %67 = vector.load %arg8[%c0_28, %c0_29] : memref<1x32xf32, #tpu.memory_space<vmem>>, vector<1x32xf32>
    tpu.vector_store %arg8[%c0_28, %c0_29], %66 {strides = array<i32>} : memref<1x32xf32, #tpu.memory_space<vmem>>, vector<1x32xf32>,
    %c0_30 = arith.constant 0 : index
    %c1280 = arith.constant 1280 : index
    %68 = vector.load %arg5[%c0_30, %c1280] : memref<32x1408xf32, #tpu.memory_space<vmem>>, vector<32x128xf32>
    %cst_31 = arith.constant dense<0.000000e+00> : vector<1x128xf32>
    %69 = tpu.matmul %66, %68, %cst_31 {dimension_numbers = #tpu.dot_dimension_numbers<[1], [0], [0], [1], [0, 0, 1, 1], [], []>} : vector<1x32xf32>, vector<32x128xf32>, vector<1x128xf32> -> vector<1x128xf32>
    %c0_32 = arith.constant 0 : index
    %c1024 = arith.constant 1024 : index
    %70 = vector.load %arg6[%c0_32, %c1024] : memref<1x1152xf32, #tpu.memory_space<vmem>>, vector<1x128xf32>
    %71 = arith.addf %69, %70 : vector<1x128xf32>
    %cst_33 = arith.constant dense<0xFF800000> : vector<1xf32>
    %72 = vector.multi_reduction <maximumf>, %71, %cst_33 [1] : vector<1x128xf32> to vector<1xf32>
    %73 = vector.shape_cast %72 : vector<1xf32> to vector<1x1xf32>
    %74 = vector.broadcast %73 : vector<1x1xf32> to vector<1x128xf32>
    %75 = arith.subf %71, %74 : vector<1x128xf32>
    %76 = math.exp %75 : vector<1x128xf32>
    %cst_34 = arith.constant dense<0.000000e+00> : vector<1xf32>
    %77 = vector.multi_reduction <add>, %76, %cst_34 [1] : vector<1x128xf32> to vector<1xf32>
    %78 = vector.shape_cast %77 : vector<1xf32> to vector<1x1xf32>
    %79 = math.log %78 : vector<1x1xf32>
    %80 = vector.broadcast %79 : vector<1x1xf32> to vector<1x128xf32>
    %81 = arith.subf %75, %80 : vector<1x128xf32>
    %82 = vector.extract_strided_slice %81 {offsets = [0, 0], sizes = [1, 16], strides = [1, 1]} : vector<1x128xf32> to vector<1x16xf32>
    %83 = vector.extract_strided_slice %23 {offsets = [0, 0], sizes = [1, 12], strides = [1, 1]} : vector<1x128xf32> to vector<1x12xf32>
    %cst_35 = arith.constant 0.000000e+00 : f32
    %84 = vector.broadcast %cst_35 : f32 to vector<1x68xf32>
    %85 = tpu.concatenate %82, %66, %83, %84 in 1 : vector<1x16xf32>, vector<1x32xf32>, vector<1x12xf32>, vector<1x68xf32> -> vector<1x128xf32>
    %c0_36 = arith.constant 0 : index
    %c0_37 = arith.constant 0 : index
    %c0_38 = arith.constant 0 : index
    %86 = vector.load %arg7[%c0_36, %c0_37, %c0_38] : memref<1x1x128xf32, #tpu.memory_space<vmem>>, vector<1x1x128xf32>
    %87 = vector.shape_cast %86 : vector<1x1x128xf32> to vector<1x128xf32>
    %88 = vector.shape_cast %85 : vector<1x128xf32> to vector<1x1x128xf32>
    tpu.vector_store %arg7[%c0_36, %c0_37, %c0_38], %88 {strides = array<i32>} : memref<1x1x128xf32, #tpu.memory_space<vmem>>, vector<1x1x128xf32>,
    return
  }
  func.func @transform_0(%arg0: i32, %arg1: memref<8xi32, #tpu.memory_space<smem>>) -> (i32, i32, i32) {
    %0 = arith.index_cast %arg0 : i32 to index
    %1 = memref.load %arg1[%0] : memref<8xi32, #tpu.memory_space<smem>>
    %c0_i32 = arith.constant 0 : i32
    %c0_i32_0 = arith.constant 0 : i32
    %c0_i32_1 = arith.constant 0 : i32
    return %1, %c0_i32, %c0_i32_0 : i32, i32, i32
  }
  func.func @transform_1(%arg0: i32, %arg1: memref<8xi32, #tpu.memory_space<smem>>) -> (i32, i32) {
    %c0_i32 = arith.constant 0 : i32
    %c0_i32_0 = arith.constant 0 : i32
    %c0_i32_1 = arith.constant 0 : i32
    return %c0_i32, %c0_i32_0 : i32, i32
  }
  func.func @transform_2(%arg0: i32, %arg1: memref<8xi32, #tpu.memory_space<smem>>) -> (i32, i32) {
    %c0_i32 = arith.constant 0 : i32
    %c0_i32_0 = arith.constant 0 : i32
    %c0_i32_1 = arith.constant 0 : i32
    return %c0_i32, %c0_i32_0 : i32, i32
  }
  func.func @transform_3(%arg0: i32, %arg1: memref<8xi32, #tpu.memory_space<smem>>) -> (i32, i32) {
    %c0_i32 = arith.constant 0 : i32
    %c0_i32_0 = arith.constant 0 : i32
    %c0_i32_1 = arith.constant 0 : i32
    return %c0_i32, %c0_i32_0 : i32, i32
  }
  func.func @transform_4(%arg0: i32, %arg1: memref<8xi32, #tpu.memory_space<smem>>) -> (i32, i32) {
    %c0_i32 = arith.constant 0 : i32
    %c0_i32_0 = arith.constant 0 : i32
    %c0_i32_1 = arith.constant 0 : i32
    return %c0_i32, %c0_i32_0 : i32, i32
  }
  func.func @transform_5(%arg0: i32, %arg1: memref<8xi32, #tpu.memory_space<smem>>) -> (i32, i32, i32) {
    %c0_i32 = arith.constant 0 : i32
    %c0_i32_0 = arith.constant 0 : i32
    %c0_i32_1 = arith.constant 0 : i32
    return %arg0, %c0_i32, %c0_i32_0 : i32, i32, i32
  }
}

</mosaic_0001>

<llo_original>
// kernel: tpu_custom_call.1
$region0: #{tpu_custom_call.1}
  #allocation0 [shape = 'u32[]', space=smem, size = 0x4, offset = 0x4, fixed_abs, tag = 'smem constant byte address 0x4 - core index']
  #allocation1 [shape = 'u32[144,128]{1,0:T(1,128)}', space=vmem, size = 0x12000, scoped, tag = 'internal scratch']
  #allocation2 [shape = 'f32[1,32]{1,0:T(1,128)}', space=vmem, size = 0x200, scoped, tag = 'scratch operand']
  #allocation3 [shape = 's32[1]{0}', space=sflag, size = 0x4, scoped, tag = 'scoped memory for tpu_custom_call.1']
  #allocation4 [shape = 'u8[512]{0}', space=smem, size = 0x200, scoped, tag = 'prefetched SMEM operand 0']
  %s0 = inlined_call_operand.vmem [shape: s32[8], index: 0, kind: input, shape index: {}]
  %s1 = inlined_call_operand.vmem [shape: f32[16,1,32], index: 1, kind: input, shape index: {}]
  %s2 = inlined_call_operand.vmem [shape: f32[1,32], index: 2, kind: input, shape index: {}]
  %s3 = inlined_call_operand.vmem [shape: f32[128,32], index: 3, kind: input, shape index: {}]
  %s4 = inlined_call_operand.hbm [shape: f32[32,1408], index: 4, kind: input, shape index: {}]
  %s5 = inlined_call_operand.vmem [shape: f32[1,1152], index: 5, kind: input, shape index: {}]
  %s6 = inlined_call_operand.hbm [shape: f32[8,1,128], index: 6, kind: output, shape index: {}]
  %s7 = sld [smem:[#allocation0]]
  $region61: #{tpu_custom_call.1} parent=0
    _
  %s9 = ssub.s32 1, %s7
  %s10 = scalar_select 0, %s9, %s7
  %s11 = sshll.u32 %s0, 4
  %s12 = int_to_ptr.vmem [resolvable:$true] %s11
  %14 = dma.vmem_to_smem %s12, 16, [#allocation4], [#allocation3]
  %15 = dma.done [#allocation3], 16
  %16 = sfence
  $region1: #{tpu_custom_call.1} parent=0
    #allocation5 [shape = 'u8[180224]{0}', space=vmem, size = 0x2c000, scoped, tag = 'input window, operand 4, single buffered']
    #allocation6 [shape = 's32[2]{0}', space=sflag, size = 0x8, scoped, tag = 'scoped memory for tpu_custom_call.1']
    #allocation7 [shape = 's32[2]{0}', space=sflag, size = 0x8, scoped, tag = 'scoped memory for tpu_custom_call.1']
    #allocation8 [shape = 'u8[1024]{0}', space=vmem, size = 0x400, scoped, tag = 'output window, operand 0']
    %17 = vsyncpa [#allocation6], 0
    %18 = vsyncpa [#allocation7], 0
    %s19 = scalar_lea.sflag [#allocation7], 1
    %20 = vsyncpa %s19, 0
    loop: start=0, step=1, limit=10
    $region2: #{tpu_custom_call.1} parent=1 // loop_pre_header
      _
    $region3: #{tpu_custom_call.1} parent=1 // loop_header
      %s22 = sphi 0, %s26
      %p23 = scmp.ge.s32.totalorder %s22, 10
      %s34 = sphi 0, %s36
      %s37 = sphi 0, %s34
      %s38 = sphi 0, %s37
      %s54 = sphi 0, %s38
      %s58 = sphi 0, %s58
      %s60 = sphi 0, %s58
      %s61 = sphi 0, %s60
      %s75 = sphi 0, %s61
      %s79 = sphi 0, %s79
      %s81 = sphi 0, %s79
      %s82 = sphi 0, %s81
      %s96 = sphi 0, %s82
      %s100 = sphi 0, %s100
      %s102 = sphi 0, %s100
      %s103 = sphi 0, %s102
      %s117 = sphi 0, %s103
      %s121 = sphi 0, %s121
      %s123 = sphi 0, %s121
      %s124 = sphi 0, %s123
      %s138 = sphi 0, %s124
      %s144 = sphi 0, %s146
      %s147 = sphi 0, %s144
      %s148 = sphi 0, %s147
      %s164 = sphi 0, %s148
    $region4: #{tpu_custom_call.1} parent=1 // loop_header_branch
      %25 = sbr.rel (%p23) target = $region8
    $region5: #{tpu_custom_call.1} parent=1 // loop_body
      %s27 = ssub.s32 %s22, 1
      %s28 = ssub.s32 %s22, 2
      %s29 = sadd.s32 %s22, 1
      %s30 = sld [smem:[#allocation4 + %s22]]
      %s31 = sld [smem:[#allocation4 + %s29]]
      %s32 = ssub.s32 %s30, %s31
      %p33 = scmp.eq.s32.totalorder %s32, 0
      %s35 = sadd.s32 %s34, 1
      %s36 = scalar_select %p33, %s34, %s35
      %p39 = pneg %p33
      %p40 = scmp.eq.s32.totalorder %s22, 7
      %p41 = por %p39, %p40
      %p42 = scmp.ne.s32.totalorder %s34, %s37
      %p43 = scmp.eq.s32.totalorder %s22, 0
      %p44 = por %p42, %p43
      %p45 = scmp.ne.s32.totalorder %s34, %s37
      %p46 = scmp.eq.s32.totalorder %s27, 7
      %p47 = por %p45, %p46
      %p48 = scmp.ne.s32.totalorder %s37, %s38
      %p49 = scmp.eq.s32.totalorder %s27, 0
      %p50 = por %p48, %p49
      %p51 = scmp.ne.s32.totalorder %s37, %s38
      %p52 = scmp.eq.s32.totalorder %s28, 7
      %p53 = por %p51, %p52
      %p55 = scmp.ne.s32.totalorder %s38, %s54
      %p56 = scmp.eq.s32.totalorder %s28, 0
      %p57 = por %p55, %p56
      %s59 = sadd.s32 %s58, 1
      %p62 = scmp.eq.s32.totalorder %s22, 7
      %p63 = scmp.ne.s32.totalorder %s58, %s60
      %p64 = scmp.eq.s32.totalorder %s22, 0
      %p65 = por %p63, %p64
      %p66 = scmp.ne.s32.totalorder %s58, %s60
      %p67 = scmp.eq.s32.totalorder %s27, 7
      %p68 = por %p66, %p67
      %p69 = scmp.ne.s32.totalorder %s60, %s61
      %p70 = scmp.eq.s32.totalorder %s27, 0
      %p71 = por %p69, %p70
      %p72 = scmp.ne.s32.totalorder %s60, %s61
      %p73 = scmp.eq.s32.totalorder %s28, 7
      %p74 = por %p72, %p73
      %p76 = scmp.ne.s32.totalorder %s61, %s75
      %p77 = scmp.eq.s32.totalorder %s28, 0
      %p78 = por %p76, %p77
      %s80 = sadd.s32 %s79, 1
      %p83 = scmp.eq.s32.totalorder %s22, 7
      %p84 = scmp.ne.s32.totalorder %s79, %s81
      %p85 = scmp.eq.s32.totalorder %s22, 0
      %p86 = por %p84, %p85
      %p87 = scmp.ne.s32.totalorder %s79, %s81
      %p88 = scmp.eq.s32.totalorder %s27, 7
      %p89 = por %p87, %p88
      %p90 = scmp.ne.s32.totalorder %s81, %s82
      %p91 = scmp.eq.s32.totalorder %s27, 0
      %p92 = por %p90, %p91
      %p93 = scmp.ne.s32.totalorder %s81, %s82
      %p94 = scmp.eq.s32.totalorder %s28, 7
      %p95 = por %p93, %p94
      %p97 = scmp.ne.s32.totalorder %s82, %s96
      %p98 = scmp.eq.s32.totalorder %s28, 0
      %p99 = por %p97, %p98
      %s101 = sadd.s32 %s100, 1
      %p104 = scmp.eq.s32.totalorder %s22, 7
      %p105 = scmp.ne.s32.totalorder %s100, %s102
      %p106 = scmp.eq.s32.totalorder %s22, 0
      %p107 = por %p105, %p106
      %p108 = scmp.ne.s32.totalorder %s100, %s102
      %p109 = scmp.eq.s32.totalorder %s27, 7
      %p110 = por %p108, %p109
      %p111 = scmp.ne.s32.totalorder %s102, %s103
      %p112 = scmp.eq.s32.totalorder %s27, 0
      %p113 = por %p111, %p112
      %p114 = scmp.ne.s32.totalorder %s102, %s103
      %p115 = scmp.eq.s32.totalorder %s28, 7
      %p116 = por %p114, %p115
      %p118 = scmp.ne.s32.totalorder %s103, %s117
      %p119 = scmp.eq.s32.totalorder %s28, 0
      %p120 = por %p118, %p119
      %s122 = sadd.s32 %s121, 1
      %p125 = scmp.eq.s32.totalorder %s22, 7
      %p126 = scmp.ne.s32.totalorder %s121, %s123
      %p127 = scmp.eq.s32.totalorder %s22, 0
      %p128 = por %p126, %p127
      %p129 = scmp.ne.s32.totalorder %s121, %s123
      %p130 = scmp.eq.s32.totalorder %s27, 7
      %p131 = por %p129, %p130
      %p132 = scmp.ne.s32.totalorder %s123, %s124
      %p133 = scmp.eq.s32.totalorder %s27, 0
      %p134 = por %p132, %p133
      %p135 = scmp.ne.s32.totalorder %s123, %s124
      %p136 = scmp.eq.s32.totalorder %s28, 7
      %p137 = por %p135, %p136
      %p139 = scmp.ne.s32.totalorder %s124, %s138
      %p140 = scmp.eq.s32.totalorder %s28, 0
      %p141 = por %p139, %p140
      %s142 = ssub.s32 %s22, %s29
      %p143 = scmp.eq.s32.totalorder %s142, 0
      %s145 = sadd.s32 %s144, 1
      %s146 = scalar_select %p143, %s144, %s145
      %p149 = pneg %p143
      %p150 = scmp.eq.s32.totalorder %s22, 7
      %p151 = por %p149, %p150
      %p152 = scmp.ne.s32.totalorder %s144, %s147
      %p153 = scmp.eq.s32.totalorder %s22, 0
      %p154 = por %p152, %p153
      %p155 = scmp.ne.s32.totalorder %s144, %s147
      %p156 = scmp.eq.s32.totalorder %s27, 7
      %p157 = por %p155, %p156
      %p158 = scmp.ne.s32.totalorder %s147, %s148
      %p159 = scmp.eq.s32.totalorder %s27, 0
      %p160 = por %p158, %p159
      %p161 = scmp.ne.s32.totalorder %s147, %s148
      %p162 = scmp.eq.s32.totalorder %s28, 7
      %p163 = por %p161, %p162
      %p165 = scmp.ne.s32.totalorder %s148, %s164
      %p166 = scmp.eq.s32.totalorder %s28, 0
      %p167 = por %p165, %p166
      %p168 = scmp.le.s32.totalorder 1, %s22
      %p169 = scmp.lt.s32.totalorder %s22, 9
      %p170 = pnand %p168, %p169
      %p171 = pneg %p170
      // Predicated region
      $region9: #{tpu_custom_call.1} parent=5 // pred_check
        _
      $region10: #{tpu_custom_call.1} parent=5 // pred_check_branch
        %173 = sbr.rel (%p170) target = $region12
      $region11: #{tpu_custom_call.1} parent=5 // pred_region
        %s174 = ssub.s32 %s22, 1
        // Predicated region
        $region13: #{tpu_custom_call.1} parent=11 // pred_check
          %p175 = pneg %p71
        $region14: #{tpu_custom_call.1} parent=11 // pred_check_branch
          %177 = sbr.rel (%p175) target = $region16
        $region15: #{tpu_custom_call.1} parent=11 // pred_region
          _
        $region16: #{tpu_custom_call.1} parent=11 // pred_fallthru
          _
        // Predicated region
        $region17: #{tpu_custom_call.1} parent=11 // pred_check
          %p178 = pneg %p92
        $region18: #{tpu_custom_call.1} parent=11 // pred_check_branch
          %180 = sbr.rel (%p178) target = $region20
        $region19: #{tpu_custom_call.1} parent=11 // pred_region
          _
        $region20: #{tpu_custom_call.1} parent=11 // pred_fallthru
          _
        // Predicated region
        $region21: #{tpu_custom_call.1} parent=11 // pred_check
          %p181 = pneg %p113
        $region22: #{tpu_custom_call.1} parent=11 // pred_check_branch
          %183 = sbr.rel (%p181) target = $region24
        $region23: #{tpu_custom_call.1} parent=11 // pred_region
          %s185 = ssub.s32 5632, 5632
          %186 = vsyncadd [#allocation6], %s185
          %s187 = sshll.u32 [#allocation5], 4
          %s188 = int_to_ptr.vmem [resolvable:$true] %s187
          %193 = dma.hbm_to_vmem [thread:$0]  %s4, 5632, %s188, [#allocation6], 1408, 1408, 88
        $region24: #{tpu_custom_call.1} parent=11 // pred_fallthru
          _
        // Predicated region
        $region25: #{tpu_custom_call.1} parent=11 // pred_check
          %p194 = pneg %p134
        $region26: #{tpu_custom_call.1} parent=11 // pred_check_branch
          %196 = sbr.rel (%p194) target = $region28
        $region27: #{tpu_custom_call.1} parent=11 // pred_region
          _
        $region28: #{tpu_custom_call.1} parent=11 // pred_fallthru
          _
      $region12: #{tpu_custom_call.1} parent=5 // pred_fallthru
        _
      %p197 = scmp.lt.s32.totalorder %s22, 8
      // Predicated region
      $region29: #{tpu_custom_call.1} parent=5 // pred_check
        %p198 = pneg %p197
      $region30: #{tpu_custom_call.1} parent=5 // pred_check_branch
        %200 = sbr.rel (%p198) target = $region32
      $region31: #{tpu_custom_call.1} parent=5 // pred_region
        // Predicated region
        $region33: #{tpu_custom_call.1} parent=31 // pred_check
          %p201 = pneg %p44
        $region34: #{tpu_custom_call.1} parent=31 // pred_check_branch
          %203 = sbr.rel (%p201) target = $region36
        $region35: #{tpu_custom_call.1} parent=31 // pred_region
          %s204 = sld [smem:[#allocation4 + %s22]]
          %p205 = scmp.lt.s32.totalorder %s204, 15
          %s206 = scalar_select %p205, %s204, 15
          %s207 = scalar_lea.vmem %s1, %s206
          %s208 = sld [smem:[#allocation4 + %s22]]
        $region36: #{tpu_custom_call.1} parent=31 // pred_fallthru
          _
      $region32: #{tpu_custom_call.1} parent=5 // pred_fallthru
        _
      %p209 = scmp.le.s32.totalorder 1, %s22
      %p210 = scmp.lt.s32.totalorder %s22, 9
      %p211 = pnand %p209, %p210
      %p212 = pneg %p211
      // Predicated region
      $region37: #{tpu_custom_call.1} parent=5 // pred_check
        _
      $region38: #{tpu_custom_call.1} parent=5 // pred_check_branch
        %214 = sbr.rel (%p211) target = $region40
      $region39: #{tpu_custom_call.1} parent=5 // pred_region
        %s215 = ssub.s32 %s22, 1
        // Predicated region
        $region41: #{tpu_custom_call.1} parent=39 // pred_check
          %p216 = pneg %p113
        $region42: #{tpu_custom_call.1} parent=39 // pred_check_branch
          %218 = sbr.rel (%p216) target = $region44
        $region43: #{tpu_custom_call.1} parent=39 // pred_region
          %219 = dma.done [#allocation6], 5632
        $region44: #{tpu_custom_call.1} parent=39 // pred_fallthru
          _
        %s220 = sld [smem:[#allocation4 + %s27]]
        %p221 = scmp.lt.s32.totalorder %s220, 15
        %s222 = scalar_select %p221, %s220, 15
        %s223 = scalar_lea.vmem %s1, %s222
        %p224 = pneg %p50
        %p225 = pneg %p47
        %p226 = pneg %p71
        %p227 = pneg %p68
        %p228 = pneg %p92
        %p229 = pneg %p89
        %p230 = pneg %p113
        %p231 = pneg %p110
        %p232 = pneg %p134
        %p233 = pneg %p131
        %p234 = pneg %p160
        %p235 = pneg %p157
        %s236 = sand.u32 %s147, 1
        %s237 = scalar_lea.sflag [#allocation7], %s236
        %s238 = sand.u32 %s147, 1
        %s239 = scalar_lea.vmem [#allocation8], %s238
        %s240 = sld [smem:[#allocation4 + %s27]]
        %p241 = scmp.lt.s32.totalorder %s240, 15
        %s242 = scalar_select %p241, %s240, 15
        %s243 = scalar_lea.vmem %s1, %s242
        %s244 = sld [smem:[#allocation4 + %s27]]
        %p245 = scmp.eq.s32.totalorder %s27, 0
        // Predicated region
        $region45: #{tpu_custom_call.1} parent=39 // pred_check
          %p246 = pneg %p245
        $region46: #{tpu_custom_call.1} parent=39 // pred_check_branch
          %248 = sbr.rel (%p246) target = $region48
        $region47: #{tpu_custom_call.1} parent=39 // pred_region
          %v249 = vld [vmem:[%s2] sm:$0x1]
          %vm250 = vcmask 253952
          %251 = vst.msk [vmem:[#allocation2] sm:$0x1] %vm250, %v249
        $region48: #{tpu_custom_call.1} parent=39 // pred_fallthru
          _
        %v252 = vld [vmem:[%s243] sm:$0x1]
        %v253 = vld [vmem:[#allocation2] sm:$0x1]
        %v254 = vld [vmem:[#allocation5] sm:$0xff]
        %v255 = vld [vmem:[#allocation5 + $0x8] sm:$0xff]
        %v256 = vld [vmem:[#allocation5 + $0x58] sm:$0xff]
        %v257 = vld [vmem:[#allocation5 + $0x60] sm:$0xff]
        %v258 = vld [vmem:[#allocation5 + $0xb0] sm:$0xff]
        %v259 = vld [vmem:[#allocation5 + $0xb8] sm:$0xff]
        %v260 = vld [vmem:[#allocation5 + $0x108] sm:$0xff]
        %v261 = vld [vmem:[#allocation5 + $0x110] sm:$0xff]
        %vm262 = vcmask 261120
        %v264 = vsel %vm262, %v252, 0
        %266 = vmatprep.subr.mxu0 0.0
        %267 = vmatpush1.msra.mxu0 0.0
        %268 = vmatprep.subr.mxu0 0.0
        %269 = vmatpush1.msra.mxu0 0.0
        %270 = vmatprep.subr.mxu0 0.0
        %271 = vmatpush1.msra.mxu0 0.0
        %272 = vmatprep.subr.mxu0 0.0
        %273 = vmatpush1.msra.mxu0 0.0
        %274 = vmatprep.subr.mxu0 0.0
        %275 = vmatpush1.msra.mxu0 0.0
        %276 = vmatprep.subr.mxu0 0.0
        %277 = vmatpush1.msra.mxu0 0.0
        %278 = vmatprep.subr.mxu0 0.0
        %279 = vmatpush1.msra.mxu0 0.0
        %280 = vmatprep.subr.mxu0 0.0
        %281 = vmatpush1.msra.mxu0 0.0
        %282 = vmatprep.subr.mxu0 0.0
        %283 = vmatpush1.msra.mxu0 0.0
        %284 = vmatprep.subr.mxu0 0.0
        %285 = vmatpush1.msra.mxu0 0.0
        %286 = vmatprep.subr.mxu0 0.0
        %287 = vmatpush1.msra.mxu0 0.0
        %288 = vmatprep.subr.mxu0 0.0
        %289 = vmatpush1.msra.mxu0 0.0
        %290 = vmatprep.subr.mxu0 %v261
        %291 = vmatpush1.msra.mxu0 %v260
        %292 = vmatprep.subr.mxu0 %v259
        %293 = vmatpush1.msra.mxu0 %v258
        %294 = vmatprep.subr.mxu0 %v257
        %295 = vmatpush1.msra.mxu0 %v256
        %296 = vmatprep.subr.mxu0 %v255
        %297 = vmatpush1.msra.mxu0 %v254
        %298 = vmatprep.subr.mxu0 0.0
        %299 = vmatpush2.msra.mxu0 0.0
        %300 = vmatprep.subr.mxu0 0.0
        %301 = vmatpush2.msra.mxu0 0.0
        %302 = vmatprep.subr.mxu0 0.0
        %303 = vmatpush2.msra.mxu0 0.0
        %304 = vmatprep.subr.mxu0 0.0
        %305 = vmatpush2.msra.mxu0 0.0
        %306 = vmatprep.subr.mxu0 0.0
        %307 = vmatpush2.msra.mxu0 0.0
        %308 = vmatprep.subr.mxu0 0.0
        %309 = vmatpush2.msra.mxu0 0.0
        %310 = vmatprep.subr.mxu0 0.0
        %311 = vmatpush2.msra.mxu0 0.0
        %312 = vmatprep.subr.mxu0 0.0
        %313 = vmatpush2.msra.mxu0 0.0
        %314 = vmatprep.subr.mxu0 0.0
        %315 = vmatpush2.msra.mxu0 0.0
        %316 = vmatprep.subr.mxu0 0.0
        %317 = vmatpush2.msra.mxu0 0.0
        %318 = vmatprep.subr.mxu0 0.0
        %319 = vmatpush2.msra.mxu0 0.0
        %320 = vmatprep.subr.mxu0 0.0
        %321 = vmatpush2.msra.mxu0 0.0
        %322 = vmatprep.subr.mxu0 0.0
        %323 = vmatpush2.msra.mxu0 0.0
        %324 = vmatprep.subr.mxu0 0.0
        %325 = vmatpush2.msra.mxu0 0.0
        %326 = vmatprep.subr.mxu0 0.0
        %327 = vmatpush2.msra.mxu0 0.0
        %328 = vmatprep.subr.mxu0 0.0
        %329 = vmatpush2.msra.mxu0 0.0
        %330 = vmatprep.mubr.f32.mxu0 0.0
        %331 = vmatmul.mubr.f32.gmra.mxu0 %v264
        %v332 = vpop.f32.mrf.mxu0
        %v333 = vadd.f32 0.0, %v332
        %v334 = vpop.f32.mrf.mxu0
        %v335 = vadd.f32 0.0, %v334
        %336 = vdwg.mxu0
        %v337 = vld [vmem:[#allocation5 + $0x10] sm:$0xff]
        %v338 = vld [vmem:[#allocation5 + $0x18] sm:$0xff]
        %v339 = vld [vmem:[#allocation5 + $0x20] sm:$0xff]
        %v340 = vld [vmem:[#allocation5 + $0x28] sm:$0xff]
        %v341 = vld [vmem:[#allocation5 + $0x68] sm:$0xff]
        %v342 = vld [vmem:[#allocation5 + $0x70] sm:$0xff]
        %v343 = vld [vmem:[#allocation5 + $0x78] sm:$0xff]
        %v344 = vld [vmem:[#allocation5 + $0x80] sm:$0xff]
        %v345 = vld [vmem:[#allocation5 + $0xc0] sm:$0xff]
        %v346 = vld [vmem:[#allocation5 + $0xc8] sm:$0xff]
        %v347 = vld [vmem:[#allocation5 + $0xd0] sm:$0xff]
        %v348 = vld [vmem:[#allocation5 + $0xd8] sm:$0xff]
        %v349 = vld [vmem:[#allocation5 + $0x118] sm:$0xff]
        %v350 = vld [vmem:[#allocation5 + $0x120] sm:$0xff]
        %v351 = vld [vmem:[#allocation5 + $0x128] sm:$0xff]
        %v352 = vld [vmem:[#allocation5 + $0x130] sm:$0xff]
        %v354 = vsel %vm262, %v253, 0
        %356 = vmatprep.subr.mxu0 0.0
        %357 = vmatpush1.msra.mxu0 0.0
        %358 = vmatprep.subr.mxu0 0.0
        %359 = vmatpush1.msra.mxu0 0.0
        %360 = vmatprep.subr.mxu0 0.0
        %361 = vmatpush1.msra.mxu0 0.0
        %362 = vmatprep.subr.mxu0 0.0
        %363 = vmatpush1.msra.mxu0 0.0
        %364 = vmatprep.subr.mxu0 0.0
        %365 = vmatpush1.msra.mxu0 0.0
        %366 = vmatprep.subr.mxu0 0.0
        %367 = vmatpush1.msra.mxu0 0.0
        %368 = vmatprep.subr.mxu0 0.0
        %369 = vmatpush1.msra.mxu0 0.0
        %370 = vmatprep.subr.mxu0 0.0
        %371 = vmatpush1.msra.mxu0 0.0
        %372 = vmatprep.subr.mxu0 0.0
        %373 = vmatpush1.msra.mxu0 0.0
        %374 = vmatprep.subr.mxu0 0.0
        %375 = vmatpush1.msra.mxu0 0.0
        %376 = vmatprep.subr.mxu0 0.0
        %377 = vmatpush1.msra.mxu0 0.0
        %378 = vmatprep.subr.mxu0 0.0
        %379 = vmatpush1.msra.mxu0 0.0
        %380 = vmatprep.subr.mxu0 %v350
        %381 = vmatpush1.msra.mxu0 %v349
        %382 = vmatprep.subr.mxu0 %v346
        %383 = vmatpush1.msra.mxu0 %v345
        %384 = vmatprep.subr.mxu0 %v342
        %385 = vmatpush1.msra.mxu0 %v341
        %386 = vmatprep.subr.mxu0 %v338
        %387 = vmatpush1.msra.mxu0 %v337
        %388 = vmatprep.subr.mxu0 0.0
        %389 = vmatpush2.msra.mxu0 0.0
        %390 = vmatprep.subr.mxu0 0.0
        %391 = vmatpush2.msra.mxu0 0.0
        %392 = vmatprep.subr.mxu0 0.0
        %393 = vmatpush2.msra.mxu0 0.0
        %394 = vmatprep.subr.mxu0 0.0
        %395 = vmatpush2.msra.mxu0 0.0
        %396 = vmatprep.subr.mxu0 0.0
        %397 = vmatpush2.msra.mxu0 0.0
        %398 = vmatprep.subr.mxu0 0.0
        %399 = vmatpush2.msra.mxu0 0.0
        %400 = vmatprep.subr.mxu0 0.0
        %401 = vmatpush2.msra.mxu0 0.0
        %402 = vmatprep.subr.mxu0 0.0
        %403 = vmatpush2.msra.mxu0 0.0
        %404 = vmatprep.subr.mxu0 0.0
        %405 = vmatpush2.msra.mxu0 0.0
        %406 = vmatprep.subr.mxu0 0.0
        %407 = vmatpush2.msra.mxu0 0.0
        %408 = vmatprep.subr.mxu0 0.0
        %409 = vmatpush2.msra.mxu0 0.0
        %410 = vmatprep.subr.mxu0 0.0
        %411 = vmatpush2.msra.mxu0 0.0
        %412 = vmatprep.subr.mxu0 0.0
        %413 = vmatpush2.msra.mxu0 0.0
        %414 = vmatprep.subr.mxu0 0.0
        %415 = vmatpush2.msra.mxu0 0.0
        %416 = vmatprep.subr.mxu0 0.0
        %417 = vmatpush2.msra.mxu0 0.0
        %418 = vmatprep.subr.mxu0 0.0
        %419 = vmatpush2.msra.mxu0 0.0
        %420 = vmatprep.mubr.f32.mxu0 0.0
        %421 = vmatmul.mubr.f32.gmra.mxu0 %v354
        %v422 = vpop.f32.mrf.mxu0
        %v423 = vadd.f32 0.0, %v422
        %v424 = vpop.f32.mrf.mxu0
        %v425 = vadd.f32 0.0, %v424
        %426 = vdwg.mxu0
        %427 = vmatprep.subr.mxu0 0.0
        %428 = vmatpush1.msra.mxu0 0.0
        %429 = vmatprep.subr.mxu0 0.0
        %430 = vmatpush1.msra.mxu0 0.0
        %431 = vmatprep.subr.mxu0 0.0
        %432 = vmatpush1.msra.mxu0 0.0
        %433 = vmatprep.subr.mxu0 0.0
        %434 = vmatpush1.msra.mxu0 0.0
        %435 = vmatprep.subr.mxu0 0.0
        %436 = vmatpush1.msra.mxu0 0.0
        %437 = vmatprep.subr.mxu0 0.0
        %438 = vmatpush1.msra.mxu0 0.0
        %439 = vmatprep.subr.mxu0 0.0
        %440 = vmatpush1.msra.mxu0 0.0
        %441 = vmatprep.subr.mxu0 0.0
        %442 = vmatpush1.msra.mxu0 0.0
        %443 = vmatprep.subr.mxu0 0.0
        %444 = vmatpush1.msra.mxu0 0.0
        %445 = vmatprep.subr.mxu0 0.0
        %446 = vmatpush1.msra.mxu0 0.0
        %447 = vmatprep.subr.mxu0 0.0
        %448 = vmatpush1.msra.mxu0 0.0
        %449 = vmatprep.subr.mxu0 0.0
        %450 = vmatpush1.msra.mxu0 0.0
        %451 = vmatprep.subr.mxu0 %v352
        %452 = vmatpush1.msra.mxu0 %v351
        %453 = vmatprep.subr.mxu0 %v348
        %454 = vmatpush1.msra.mxu0 %v347
        %455 = vmatprep.subr.mxu0 %v344
        %456 = vmatpush1.msra.mxu0 %v343
        %457 = vmatprep.subr.mxu0 %v340
        %458 = vmatpush1.msra.mxu0 %v339
        %459 = vmatprep.subr.mxu0 0.0
        %460 = vmatpush2.msra.mxu0 0.0
        %461 = vmatprep.subr.mxu0 0.0
        %462 = vmatpush2.msra.mxu0 0.0
        %463 = vmatprep.subr.mxu0 0.0
        %464 = vmatpush2.msra.mxu0 0.0
        %465 = vmatprep.subr.mxu0 0.0
        %466 = vmatpush2.msra.mxu0 0.0
        %467 = vmatprep.subr.mxu0 0.0
        %468 = vmatpush2.msra.mxu0 0.0
        %469 = vmatprep.subr.mxu0 0.0
        %470 = vmatpush2.msra.mxu0 0.0
        %471 = vmatprep.subr.mxu0 0.0
        %472 = vmatpush2.msra.mxu0 0.0
        %473 = vmatprep.subr.mxu0 0.0
        %474 = vmatpush2.msra.mxu0 0.0
        %475 = vmatprep.subr.mxu0 0.0
        %476 = vmatpush2.msra.mxu0 0.0
        %477 = vmatprep.subr.mxu0 0.0
        %478 = vmatpush2.msra.mxu0 0.0
        %479 = vmatprep.subr.mxu0 0.0
        %480 = vmatpush2.msra.mxu0 0.0
        %481 = vmatprep.subr.mxu0 0.0
        %482 = vmatpush2.msra.mxu0 0.0
        %483 = vmatprep.subr.mxu0 0.0
        %484 = vmatpush2.msra.mxu0 0.0
        %485 = vmatprep.subr.mxu0 0.0
        %486 = vmatpush2.msra.mxu0 0.0
        %487 = vmatprep.subr.mxu0 0.0
        %488 = vmatpush2.msra.mxu0 0.0
        %489 = vmatprep.subr.mxu0 0.0
        %490 = vmatpush2.msra.mxu0 0.0
        %491 = vmatprep.mubr.f32.mxu0 0.0
        %492 = vmatmul.mubr.f32.gmra.mxu0 %v354
        %v493 = vpop.f32.mrf.mxu0
        %v494 = vadd.f32 0.0, %v493
        %v495 = vpop.f32.mrf.mxu0
        %v496 = vadd.f32 0.0, %v495
        %497 = vdwg.mxu0
        %v498 = vadd.f32 %v333, %v423
        %v499 = vld [vmem:[%s5] sm:$0x1]
        %v500 = vadd.f32 %v498, %v499
        %vm501 = vcmask 1040384
        %v502 = vsel %vm501, %v500, -inf
        %503 = vmax.xlane.f32.xlu0 %v502
        %v504 = vpop.xlane.xlu0 %503
        %v505 = vsub.f32 %v500, %v504
        %v506 = vmul.f32 %v505, 1.442695
        %v507 = vpow.pop %v506
        %v508 = vsel %vm501, %v507, 0.0
        %509 = vadd.xlane.f32.xlu0 %v508
        %v510 = vpop.xlane.xlu0 %509
        %v511 = vrcp.pop %v510
        %v512 = vmul.f32 %v507, %v511
        %v513 = vld [vmem:[%s3] sm:$0xff]
        %v514 = vld [vmem:[%s3 + $0x8] sm:$0xff]
        %v515 = vld [vmem:[%s3 + $0x10] sm:$0xff]
        %v516 = vld [vmem:[%s3 + $0x18] sm:$0xff]
        %v517 = vld [vmem:[%s3 + $0x20] sm:$0xff]
        %v518 = vld [vmem:[%s3 + $0x28] sm:$0xff]
        %v519 = vld [vmem:[%s3 + $0x30] sm:$0xff]
        %v520 = vld [vmem:[%s3 + $0x38] sm:$0xff]
        %v521 = vld [vmem:[%s3 + $0x40] sm:$0xff]
        %v522 = vld [vmem:[%s3 + $0x48] sm:$0xff]
        %v523 = vld [vmem:[%s3 + $0x50] sm:$0xff]
        %v524 = vld [vmem:[%s3 + $0x58] sm:$0xff]
        %v525 = vld [vmem:[%s3 + $0x60] sm:$0xff]
        %v526 = vld [vmem:[%s3 + $0x68] sm:$0xff]
        %v527 = vld [vmem:[%s3 + $0x70] sm:$0xff]
        %v528 = vld [vmem:[%s3 + $0x78] sm:$0xff]
        %529 = vmatprep.subr.mxu0 0.0
        %530 = vmatpush1.msra.mxu0 %v528
        %531 = vmatprep.subr.mxu0 0.0
        %532 = vmatpush1.msra.mxu0 %v527
        %533 = vmatprep.subr.mxu0 0.0
        %534 = vmatpush1.msra.mxu0 %v526
        %535 = vmatprep.subr.mxu0 0.0
        %536 = vmatpush1.msra.mxu0 %v525
        %537 = vmatprep.subr.mxu0 0.0
        %538 = vmatpush1.msra.mxu0 %v524
        %539 = vmatprep.subr.mxu0 0.0
        %540 = vmatpush1.msra.mxu0 %v523
        %541 = vmatprep.subr.mxu0 0.0
        %542 = vmatpush1.msra.mxu0 %v522
        %543 = vmatprep.subr.mxu0 0.0
        %544 = vmatpush1.msra.mxu0 %v521
        %545 = vmatprep.subr.mxu0 0.0
        %546 = vmatpush1.msra.mxu0 %v520
        %547 = vmatprep.subr.mxu0 0.0
        %548 = vmatpush1.msra.mxu0 %v519
        %549 = vmatprep.subr.mxu0 0.0
        %550 = vmatpush1.msra.mxu0 %v518
        %551 = vmatprep.subr.mxu0 0.0
        %552 = vmatpush1.msra.mxu0 %v517
        %553 = vmatprep.subr.mxu0 0.0
        %554 = vmatpush1.msra.mxu0 %v516
        %555 = vmatprep.subr.mxu0 0.0
        %556 = vmatpush1.msra.mxu0 %v515
        %557 = vmatprep.subr.mxu0 0.0
        %558 = vmatpush1.msra.mxu0 %v514
        %559 = vmatprep.subr.mxu0 0.0
        %560 = vmatpush1.msra.mxu0 %v513
        %561 = vmatprep.subr.mxu0 0.0
        %562 = vmatpush2.msra.mxu0 0.0
        %563 = vmatprep.subr.mxu0 0.0
        %564 = vmatpush2.msra.mxu0 0.0
        %565 = vmatprep.subr.mxu0 0.0
        %566 = vmatpush2.msra.mxu0 0.0
        %567 = vmatprep.subr.mxu0 0.0
        %568 = vmatpush2.msra.mxu0 0.0
        %569 = vmatprep.subr.mxu0 0.0
        %570 = vmatpush2.msra.mxu0 0.0
        %571 = vmatprep.subr.mxu0 0.0
        %572 = vmatpush2.msra.mxu0 0.0
        %573 = vmatprep.subr.mxu0 0.0
        %574 = vmatpush2.msra.mxu0 0.0
        %575 = vmatprep.subr.mxu0 0.0
        %576 = vmatpush2.msra.mxu0 0.0
        %577 = vmatprep.subr.mxu0 0.0
        %578 = vmatpush2.msra.mxu0 0.0
        %579 = vmatprep.subr.mxu0 0.0
        %580 = vmatpush2.msra.mxu0 0.0
        %581 = vmatprep.subr.mxu0 0.0
        %582 = vmatpush2.msra.mxu0 0.0
        %583 = vmatprep.subr.mxu0 0.0
        %584 = vmatpush2.msra.mxu0 0.0
        %585 = vmatprep.subr.mxu0 0.0
        %586 = vmatpush2.msra.mxu0 0.0
        %587 = vmatprep.subr.mxu0 0.0
        %588 = vmatpush2.msra.mxu0 0.0
        %589 = vmatprep.subr.mxu0 0.0
        %590 = vmatpush2.msra.mxu0 0.0
        %591 = vmatprep.subr.mxu0 0.0
        %592 = vmatpush2.msra.mxu0 0.0
        %593 = vmatprep.mubr.f32.mxu0 0.0
        %594 = vmatmul.mubr.f32.gmra.mxu0 %v512
        %v595 = vpop.f32.mrf.mxu0
        %v596 = vadd.f32 0.0, %v595
        %v597 = vpop.f32.mrf.mxu0
        %598 = vdwg.mxu0
        %v599 = vld [vmem:[#allocation5 + $0x30] sm:$0xff]
        %v600 = vld [vmem:[#allocation5 + $0x88] sm:$0xff]
        %v601 = vld [vmem:[#allocation5 + $0xe0] sm:$0xff]
        %v602 = vld [vmem:[#allocation5 + $0x138] sm:$0xff]
        %v604 = vsel %vm262, %v596, 0
        %606 = vmatprep.subr.mxu0 0.0
        %607 = vmatpush1.msra.mxu0 0.0
        %608 = vmatprep.subr.mxu0 0.0
        %609 = vmatpush1.msra.mxu0 0.0
        %610 = vmatprep.subr.mxu0 0.0
        %611 = vmatpush1.msra.mxu0 0.0
        %612 = vmatprep.subr.mxu0 0.0
        %613 = vmatpush1.msra.mxu0 0.0
        %614 = vmatprep.subr.mxu0 0.0
        %615 = vmatpush1.msra.mxu0 0.0
        %616 = vmatprep.subr.mxu0 0.0
        %617 = vmatpush1.msra.mxu0 0.0
        %618 = vmatprep.subr.mxu0 0.0
        %619 = vmatpush1.msra.mxu0 0.0
        %620 = vmatprep.subr.mxu0 0.0
        %621 = vmatpush1.msra.mxu0 0.0
        %622 = vmatprep.subr.mxu0 0.0
        %623 = vmatpush1.msra.mxu0 0.0
        %624 = vmatprep.subr.mxu0 0.0
        %625 = vmatpush1.msra.mxu0 0.0
        %626 = vmatprep.subr.mxu0 0.0
        %627 = vmatpush1.msra.mxu0 0.0
        %628 = vmatprep.subr.mxu0 0.0
        %629 = vmatpush1.msra.mxu0 0.0
        %630 = vmatprep.subr.mxu0 0.0
        %631 = vmatpush1.msra.mxu0 %v602
        %632 = vmatprep.subr.mxu0 0.0
        %633 = vmatpush1.msra.mxu0 %v601
        %634 = vmatprep.subr.mxu0 0.0
        %635 = vmatpush1.msra.mxu0 %v600
        %636 = vmatprep.subr.mxu0 0.0
        %637 = vmatpush1.msra.mxu0 %v599
        %638 = vmatprep.subr.mxu0 0.0
        %639 = vmatpush2.msra.mxu0 0.0
        %640 = vmatprep.subr.mxu0 0.0
        %641 = vmatpush2.msra.mxu0 0.0
        %642 = vmatprep.subr.mxu0 0.0
        %643 = vmatpush2.msra.mxu0 0.0
        %644 = vmatprep.subr.mxu0 0.0
        %645 = vmatpush2.msra.mxu0 0.0
        %646 = vmatprep.subr.mxu0 0.0
        %647 = vmatpush2.msra.mxu0 0.0
        %648 = vmatprep.subr.mxu0 0.0
        %649 = vmatpush2.msra.mxu0 0.0
        %650 = vmatprep.subr.mxu0 0.0
        %651 = vmatpush2.msra.mxu0 0.0
        %652 = vmatprep.subr.mxu0 0.0
        %653 = vmatpush2.msra.mxu0 0.0
        %654 = vmatprep.subr.mxu0 0.0
        %655 = vmatpush2.msra.mxu0 0.0
        %656 = vmatprep.subr.mxu0 0.0
        %657 = vmatpush2.msra.mxu0 0.0
        %658 = vmatprep.subr.mxu0 0.0
        %659 = vmatpush2.msra.mxu0 0.0
        %660 = vmatprep.subr.mxu0 0.0
        %661 = vmatpush2.msra.mxu0 0.0
        %662 = vmatprep.subr.mxu0 0.0
        %663 = vmatpush2.msra.mxu0 0.0
        %664 = vmatprep.subr.mxu0 0.0
        %665 = vmatpush2.msra.mxu0 0.0
        %666 = vmatprep.subr.mxu0 0.0
        %667 = vmatpush2.msra.mxu0 0.0
        %668 = vmatprep.subr.mxu0 0.0
        %669 = vmatpush2.msra.mxu0 0.0
        %670 = vmatprep.mubr.f32.mxu0 0.0
        %671 = vmatmul.mubr.f32.gmra.mxu0 %v604
        %v672 = vpop.f32.mrf.mxu0
        %v673 = vadd.f32 0.0, %v672
        %v674 = vpop.f32.mrf.mxu0
        %675 = vdwg.mxu0
        %v676 = vadd.f32 %v335, %v673
        %v677 = vld [vmem:[%s5 + $0x1] sm:$0x1]
        %v678 = vadd.f32 %v676, %v677
        %v679 = vmax.f32 %v678, 0.0
        %v680 = vld [vmem:[#allocation5 + $0x38] sm:$0xff]
        %v681 = vld [vmem:[#allocation5 + $0x40] sm:$0xff]
        %v682 = vld [vmem:[#allocation5 + $0x48] sm:$0xff]
        %v683 = vld [vmem:[#allocation5 + $0x90] sm:$0xff]
        %v684 = vld [vmem:[#allocation5 + $0x98] sm:$0xff]
        %v685 = vld [vmem:[#allocation5 + $0xa0] sm:$0xff]
        %v686 = vld [vmem:[#allocation5 + $0xe8] sm:$0xff]
        %v687 = vld [vmem:[#allocation5 + $0xf0] sm:$0xff]
        %v688 = vld [vmem:[#allocation5 + $0xf8] sm:$0xff]
        %v689 = vld [vmem:[#allocation5 + $0x140] sm:$0xff]
        %v690 = vld [vmem:[#allocation5 + $0x148] sm:$0xff]
        %v691 = vld [vmem:[#allocation5 + $0x150] sm:$0xff]
        %v692 = vld [vmem:[%s5 + $0x2] sm:$0x7]
        %v694 = vlaneseq
        %v695 = vshrl.u32 %v694, 7
        %v696 = vsub.s32 0, %v695
        %v697 = vrot.slane %v692, %v696
        %v698 = vlaneseq
        %v699 = vshrl.u32 %v698, 7
        %v700 = vsub.s32 1, %v699
        %v701 = vrot.slane %v692, %v700
        %v702 = vlaneseq
        %v703 = vshrl.u32 %v702, 7
        %v704 = vsub.s32 2, %v703
        %v705 = vrot.slane %v692, %v704
        %v710 = vsel %vm262, %v679, 0
        %712 = vmatprep.subr.mxu0 0.0
        %713 = vmatpush1.msra.mxu0 0.0
        %714 = vmatprep.subr.mxu0 0.0
        %715 = vmatpush1.msra.mxu0 0.0
        %716 = vmatprep.subr.mxu0 0.0
        %717 = vmatpush1.msra.mxu0 0.0
        %718 = vmatprep.subr.mxu0 0.0
        %719 = vmatpush1.msra.mxu0 0.0
        %720 = vmatprep.subr.mxu0 0.0
        %721 = vmatpush1.msra.mxu0 0.0
        %722 = vmatprep.subr.mxu0 0.0
        %723 = vmatpush1.msra.mxu0 0.0
        %724 = vmatprep.subr.mxu0 0.0
        %725 = vmatpush1.msra.mxu0 0.0
        %726 = vmatprep.subr.mxu0 0.0
        %727 = vmatpush1.msra.mxu0 0.0
        %728 = vmatprep.subr.mxu0 0.0
        %729 = vmatpush1.msra.mxu0 0.0
        %730 = vmatprep.subr.mxu0 0.0
        %731 = vmatpush1.msra.mxu0 0.0
        %732 = vmatprep.subr.mxu0 0.0
        %733 = vmatpush1.msra.mxu0 0.0
        %734 = vmatprep.subr.mxu0 0.0
        %735 = vmatpush1.msra.mxu0 0.0
        %736 = vmatprep.subr.mxu0 %v690
        %737 = vmatpush1.msra.mxu0 %v689
        %738 = vmatprep.subr.mxu0 %v687
        %739 = vmatpush1.msra.mxu0 %v686
        %740 = vmatprep.subr.mxu0 %v684
        %741 = vmatpush1.msra.mxu0 %v683
        %742 = vmatprep.subr.mxu0 %v681
        %743 = vmatpush1.msra.mxu0 %v680
        %744 = vmatprep.subr.mxu0 0.0
        %745 = vmatpush2.msra.mxu0 0.0
        %746 = vmatprep.subr.mxu0 0.0
        %747 = vmatpush2.msra.mxu0 0.0
        %748 = vmatprep.subr.mxu0 0.0
        %749 = vmatpush2.msra.mxu0 0.0
        %750 = vmatprep.subr.mxu0 0.0
        %751 = vmatpush2.msra.mxu0 0.0
        %752 = vmatprep.subr.mxu0 0.0
        %753 = vmatpush2.msra.mxu0 0.0
        %754 = vmatprep.subr.mxu0 0.0
        %755 = vmatpush2.msra.mxu0 0.0
        %756 = vmatprep.subr.mxu0 0.0
        %757 = vmatpush2.msra.mxu0 0.0
        %758 = vmatprep.subr.mxu0 0.0
        %759 = vmatpush2.msra.mxu0 0.0
        %760 = vmatprep.subr.mxu0 0.0
        %761 = vmatpush2.msra.mxu0 0.0
        %762 = vmatprep.subr.mxu0 0.0
        %763 = vmatpush2.msra.mxu0 0.0
        %764 = vmatprep.subr.mxu0 0.0
        %765 = vmatpush2.msra.mxu0 0.0
        %766 = vmatprep.subr.mxu0 0.0
        %767 = vmatpush2.msra.mxu0 0.0
        %768 = vmatprep.subr.mxu0 0.0
        %769 = vmatpush2.msra.mxu0 0.0
        %770 = vmatprep.subr.mxu0 0.0
        %771 = vmatpush2.msra.mxu0 0.0
        %772 = vmatprep.subr.mxu0 0.0
        %773 = vmatpush2.msra.mxu0 0.0
        %774 = vmatprep.subr.mxu0 0.0
        %775 = vmatpush2.msra.mxu0 0.0
        %776 = vmatprep.mubr.f32.mxu0 0.0
        %777 = vmatmul.mubr.f32.gmra.mxu0 %v710
        %v778 = vpop.f32.mrf.mxu0
        %v779 = vadd.f32 %v697, %v778
        %v780 = vpop.f32.mrf.mxu0
        %v781 = vadd.f32 %v701, %v780
        %782 = vdwg.mxu0
        %783 = vmatprep.subr.mxu0 0.0
        %784 = vmatpush1.msra.mxu0 0.0
        %785 = vmatprep.subr.mxu0 0.0
        %786 = vmatpush1.msra.mxu0 0.0
        %787 = vmatprep.subr.mxu0 0.0
        %788 = vmatpush1.msra.mxu0 0.0
        %789 = vmatprep.subr.mxu0 0.0
        %790 = vmatpush1.msra.mxu0 0.0
        %791 = vmatprep.subr.mxu0 0.0
        %792 = vmatpush1.msra.mxu0 0.0
        %793 = vmatprep.subr.mxu0 0.0
        %794 = vmatpush1.msra.mxu0 0.0
        %795 = vmatprep.subr.mxu0 0.0
        %796 = vmatpush1.msra.mxu0 0.0
        %797 = vmatprep.subr.mxu0 0.0
        %798 = vmatpush1.msra.mxu0 0.0
        %799 = vmatprep.subr.mxu0 0.0
        %800 = vmatpush1.msra.mxu0 0.0
        %801 = vmatprep.subr.mxu0 0.0
        %802 = vmatpush1.msra.mxu0 0.0
        %803 = vmatprep.subr.mxu0 0.0
        %804 = vmatpush1.msra.mxu0 0.0
        %805 = vmatprep.subr.mxu0 0.0
        %806 = vmatpush1.msra.mxu0 0.0
        %807 = vmatprep.subr.mxu0 0.0
        %808 = vmatpush1.msra.mxu0 %v691
        %809 = vmatprep.subr.mxu0 0.0
        %810 = vmatpush1.msra.mxu0 %v688
        %811 = vmatprep.subr.mxu0 0.0
        %812 = vmatpush1.msra.mxu0 %v685
        %813 = vmatprep.subr.mxu0 0.0
        %814 = vmatpush1.msra.mxu0 %v682
        %815 = vmatprep.subr.mxu0 0.0
        %816 = vmatpush2.msra.mxu0 0.0
        %817 = vmatprep.subr.mxu0 0.0
        %818 = vmatpush2.msra.mxu0 0.0
        %819 = vmatprep.subr.mxu0 0.0
        %820 = vmatpush2.msra.mxu0 0.0
        %821 = vmatprep.subr.mxu0 0.0
        %822 = vmatpush2.msra.mxu0 0.0
        %823 = vmatprep.subr.mxu0 0.0
        %824 = vmatpush2.msra.mxu0 0.0
        %825 = vmatprep.subr.mxu0 0.0
        %826 = vmatpush2.msra.mxu0 0.0
        %827 = vmatprep.subr.mxu0 0.0
        %828 = vmatpush2.msra.mxu0 0.0
        %829 = vmatprep.subr.mxu0 0.0
        %830 = vmatpush2.msra.mxu0 0.0
        %831 = vmatprep.subr.mxu0 0.0
        %832 = vmatpush2.msra.mxu0 0.0
        %833 = vmatprep.subr.mxu0 0.0
        %834 = vmatpush2.msra.mxu0 0.0
        %835 = vmatprep.subr.mxu0 0.0
        %836 = vmatpush2.msra.mxu0 0.0
        %837 = vmatprep.subr.mxu0 0.0
        %838 = vmatpush2.msra.mxu0 0.0
        %839 = vmatprep.subr.mxu0 0.0
        %840 = vmatpush2.msra.mxu0 0.0
        %841 = vmatprep.subr.mxu0 0.0
        %842 = vmatpush2.msra.mxu0 0.0
        %843 = vmatprep.subr.mxu0 0.0
        %844 = vmatpush2.msra.mxu0 0.0
        %845 = vmatprep.subr.mxu0 0.0
        %846 = vmatpush2.msra.mxu0 0.0
        %847 = vmatprep.mubr.f32.mxu0 0.0
        %848 = vmatmul.mubr.f32.gmra.mxu0 %v710
        %v849 = vpop.f32.mrf.mxu0
        %v850 = vadd.f32 %v705, %v849
        %v851 = vpop.f32.mrf.mxu0
        %852 = vdwg.mxu0
        %v853 = vld [vmem:[%s5 + $0x5] sm:$0x7]
        %v855 = vlaneseq
        %v856 = vshrl.u32 %v855, 7
        %v857 = vsub.s32 0, %v856
        %v858 = vrot.slane %v853, %v857
        %v859 = vlaneseq
        %v860 = vshrl.u32 %v859, 7
        %v861 = vsub.s32 1, %v860
        %v862 = vrot.slane %v853, %v861
        %v863 = vlaneseq
        %v864 = vshrl.u32 %v863, 7
        %v865 = vsub.s32 2, %v864
        %v866 = vrot.slane %v853, %v865
        %v870 = vadd.f32 %v425, %v858
        %v871 = vadd.f32 %v494, %v862
        %v872 = vadd.f32 %v496, %v866
        %v873 = vadd.f32 %v779, %v870
        %v874 = vxor.u32 %v873, 2147483648
        %v875 = vmul.f32 %v874, 1.442695
        %v876 = vpow.pop %v875
        %v877 = vadd.f32 %v876, 1.0
        %v878 = vrcp.pop %v877
        %v879 = vmul.f32 1.0, %v878
        %v880 = vadd.f32 %v781, %v871
        %v881 = vxor.u32 %v880, 2147483648
        %v882 = vmul.f32 %v881, 1.442695
        %v883 = vpow.pop %v882
        %v884 = vadd.f32 %v883, 1.0
        %v885 = vrcp.pop %v884
        %v886 = vmul.f32 1.0, %v885
        %v887 = vmul.f32 %v879, %v872
        %v888 = vadd.f32 %v850, %v887
        %v889 = vtanh.pop %v888
        %v890 = vsub.f32 1.0, %v886
        %v891 = vmul.f32 %v890, %v889
        %v892 = vmul.f32 %v886, %v253
        %v893 = vadd.f32 %v891, %v892
        %vm894 = vcmask 253952
        %895 = vst.msk [vmem:[#allocation2] sm:$0x1] %vm894, %v893
        %v896 = vld [vmem:[#allocation5 + $0x50] sm:$0xff]
        %v897 = vld [vmem:[#allocation5 + $0xa8] sm:$0xff]
        %v898 = vld [vmem:[#allocation5 + $0x100] sm:$0xff]
        %v899 = vld [vmem:[#allocation5 + $0x158] sm:$0xff]
        %v900 = vld [vmem:[%s5 + $0x8] sm:$0x1]
        %v902 = vsel %vm262, %v893, 0
        %904 = vmatprep.subr.mxu0 0.0
        %905 = vmatpush1.msra.mxu0 0.0
        %906 = vmatprep.subr.mxu0 0.0
        %907 = vmatpush1.msra.mxu0 0.0
        %908 = vmatprep.subr.mxu0 0.0
        %909 = vmatpush1.msra.mxu0 0.0
        %910 = vmatprep.subr.mxu0 0.0
        %911 = vmatpush1.msra.mxu0 0.0
        %912 = vmatprep.subr.mxu0 0.0
        %913 = vmatpush1.msra.mxu0 0.0
        %914 = vmatprep.subr.mxu0 0.0
        %915 = vmatpush1.msra.mxu0 0.0
        %916 = vmatprep.subr.mxu0 0.0
        %917 = vmatpush1.msra.mxu0 0.0
        %918 = vmatprep.subr.mxu0 0.0
        %919 = vmatpush1.msra.mxu0 0.0
        %920 = vmatprep.subr.mxu0 0.0
        %921 = vmatpush1.msra.mxu0 0.0
        %922 = vmatprep.subr.mxu0 0.0
        %923 = vmatpush1.msra.mxu0 0.0
        %924 = vmatprep.subr.mxu0 0.0
        %925 = vmatpush1.msra.mxu0 0.0
        %926 = vmatprep.subr.mxu0 0.0
        %927 = vmatpush1.msra.mxu0 0.0
        %928 = vmatprep.subr.mxu0 0.0
        %929 = vmatpush1.msra.mxu0 %v899
        %930 = vmatprep.subr.mxu0 0.0
        %931 = vmatpush1.msra.mxu0 %v898
        %932 = vmatprep.subr.mxu0 0.0
        %933 = vmatpush1.msra.mxu0 %v897
        %934 = vmatprep.subr.mxu0 0.0
        %935 = vmatpush1.msra.mxu0 %v896
        %936 = vmatprep.subr.mxu0 0.0
        %937 = vmatpush2.msra.mxu0 0.0
        %938 = vmatprep.subr.mxu0 0.0
        %939 = vmatpush2.msra.mxu0 0.0
        %940 = vmatprep.subr.mxu0 0.0
        %941 = vmatpush2.msra.mxu0 0.0
        %942 = vmatprep.subr.mxu0 0.0
        %943 = vmatpush2.msra.mxu0 0.0
        %944 = vmatprep.subr.mxu0 0.0
        %945 = vmatpush2.msra.mxu0 0.0
        %946 = vmatprep.subr.mxu0 0.0
        %947 = vmatpush2.msra.mxu0 0.0
        %948 = vmatprep.subr.mxu0 0.0
        %949 = vmatpush2.msra.mxu0 0.0
        %950 = vmatprep.subr.mxu0 0.0
        %951 = vmatpush2.msra.mxu0 0.0
        %952 = vmatprep.subr.mxu0 0.0
        %953 = vmatpush2.msra.mxu0 0.0
        %954 = vmatprep.subr.mxu0 0.0
        %955 = vmatpush2.msra.mxu0 0.0
        %956 = vmatprep.subr.mxu0 0.0
        %957 = vmatpush2.msra.mxu0 0.0
        %958 = vmatprep.subr.mxu0 0.0
        %959 = vmatpush2.msra.mxu0 0.0
        %960 = vmatprep.subr.mxu0 0.0
        %961 = vmatpush2.msra.mxu0 0.0
        %962 = vmatprep.subr.mxu0 0.0
        %963 = vmatpush2.msra.mxu0 0.0
        %964 = vmatprep.subr.mxu0 0.0
        %965 = vmatpush2.msra.mxu0 0.0
        %966 = vmatprep.subr.mxu0 0.0
        %967 = vmatpush2.msra.mxu0 0.0
        %968 = vmatprep.mubr.f32.mxu0 0.0
        %969 = vmatmul.mubr.f32.gmra.mxu0 %v902
        %v970 = vpop.f32.mrf.mxu0
        %v971 = vadd.f32 %v900, %v970
        %v972 = vpop.f32.mrf.mxu0
        %973 = vdwg.mxu0
        %v974 = vsel %vm501, %v971, -inf
        %975 = vmax.xlane.f32.xlu0 %v974
        %v976 = vpop.xlane.xlu0 %975
        %v977 = vsub.f32 %v971, %v976
        %v978 = vmul.f32 %v977, 1.442695
        %v979 = vpow.pop %v978
        %v980 = vsel %vm501, %v979, 0.0
        %981 = vadd.xlane.f32.xlu0 %v980
        %v982 = vpop.xlane.xlu0 %981
        %v983 = vlog2.pop %v982
        %v984 = vmul.f32 %v983, 0.6931472
        %v985 = vsub.f32 %v977, %v984
        %986 = vrot.lane.b32.xlu0 %v893, 16
        %v987 = vpop.permute.xlu0 %986
        %990 = vrot.lane.b32.xlu0 %v512, 48
        %v991 = vpop.permute.xlu0 %990
        %vm993 = vcmask 130048
        %v994 = vsel %vm993, %v985, %v987
        %vm995 = vcmask 392192
        %v996 = vsel %vm995, %v994, %v991
        %vm997 = vcmask 490496
        %v998 = vsel %vm997, %v996, 0.0
        %999 = vst [vmem:[%s239] sm:$0x1] %v998
        %s1000 = sand.u32 %s147, 1
        %s1001 = scalar_lea.sflag [#allocation7], %s1000
        %s1002 = sand.u32 %s147, 1
        %s1003 = scalar_lea.vmem [#allocation8], %s1002
        // Predicated region
        $region49: #{tpu_custom_call.1} parent=39 // pred_check
          %p1004 = pneg %p157
        $region50: #{tpu_custom_call.1} parent=39 // pred_check_branch
          %1006 = sbr.rel (%p1004) target = $region52
        $region51: #{tpu_custom_call.1} parent=39 // pred_region
          %s1008 = ssub.s32 16, 16
          %1009 = vsyncadd %s1001, %s1008
          %s1010 = smul.addr %s27, 16
          %s1011 = scalar_lea.hbm %s6, %s1010
          %s1013 = sshll.u32 %s1003, 4
          %s1014 = int_to_ptr.vmem [resolvable:$true] %s1013
          %1016 = dma.vmem_to_hbm [thread:$0]  %s1014, 16, %s1011, %s1001
        $region52: #{tpu_custom_call.1} parent=39 // pred_fallthru
          _
      $region40: #{tpu_custom_call.1} parent=5 // pred_fallthru
        _
      %p1017 = scmp.le.s32.totalorder 2, %s22
      // Predicated region
      $region53: #{tpu_custom_call.1} parent=5 // pred_check
        %p1018 = pneg %p1017
      $region54: #{tpu_custom_call.1} parent=5 // pred_check_branch
        %1020 = sbr.rel (%p1018) target = $region56
      $region55: #{tpu_custom_call.1} parent=5 // pred_region
        %s1021 = ssub.s32 %s22, 2
        // Predicated region
        $region57: #{tpu_custom_call.1} parent=55 // pred_check
          %p1022 = pneg %p163
        $region58: #{tpu_custom_call.1} parent=55 // pred_check_branch
          %1024 = sbr.rel (%p1022) target = $region60
        $region59: #{tpu_custom_call.1} parent=55 // pred_region
          %s1025 = sand.u32 %s148, 1
          %s1026 = scalar_lea.sflag [#allocation7], %s1025
          %s1027 = sand.u32 %s148, 1
          %s1028 = scalar_lea.vmem [#allocation8], %s1027
          %1029 = dma.done %s1026, 16
        $region60: #{tpu_custom_call.1} parent=55 // pred_fallthru
          _
      $region56: #{tpu_custom_call.1} parent=5 // pred_fallthru
        _
    $region6: #{tpu_custom_call.1} parent=1 // loop_footer
      %s26 = sadd.s32 1, %s22
    $region7: #{tpu_custom_call.1} parent=1 // loop_footer_branch
      %21 = sbr.rel target = $region3
    $region8: #{tpu_custom_call.1} parent=1 // loop_exit
      _
    %1030 = vsyncpa [#allocation6], 1
    %s1031 = scalar_lea.sflag [#allocation6], 1
    %1032 = vsyncpa %s1031, 1
    %1033 = vsyncpa [#allocation7], 1
    %s1034 = scalar_lea.sflag [#allocation7], 1
    %1035 = vsyncpa %s1034, 1

</llo_original>
